<compile_context>
chip_gen: v5e
topology: v5e:2x2
jax: 0.10.0
libtpu: 0.0.40
codegen_flags: <defaults>
</compile_context>

<pallas_src>
import numpy as np
import jax
import jax.numpy as jnp
from jax.experimental import pallas as pl
from jax.experimental.pallas import tpu as pltpu


def dct_gcn_kernel(x_ref, adjt_ref, m_ref, b_ref, o_ref):
    """Whole-batch fused DCT + graph-conv (single invocation, no grid).

    x_ref    : (B, T, P)  input motion
    adjt_ref : (P, P)     adjacency transposed (A^T), folded at setup
    m_ref    : (T, H)     precomputed dct_m^T @ weight
    b_ref    : (1, H)     GCN bias
    o_ref    : (B, P, H)  output node features
    """
    B, T, P = x_ref.shape
    H = m_ref.shape[1]

    # 1) Contract over joints FIRST (cheap P->P contraction, T output cols),
    #    stacked across batch: w[b,t,p] = sum_q x[b,t,q] * A[p,q].
    w = jnp.dot(x_ref[...].reshape(B * T, P), adjt_ref[...],
                preferred_element_type=jnp.float32)                 # [B*T, P]

    # 2) Tiny XLU transpose of the 4 KB intermediate -> [B, P, T] so the next
    #    matmul is a natural last-dim contraction.
    g = jnp.transpose(w.reshape(B, T, P), (0, 2, 1)).reshape(B * P, T)

    # 3) Single stacked expansion matmul over time: [B*P, T] @ [T, H].
    y = jnp.dot(g, m_ref[...], preferred_element_type=jnp.float32)  # [B*P, H]

    o_ref[...] = jnp.tanh(y + b_ref[...]).reshape(B, P, H)


def precompute_params(dct_m, adj, weight, bias):
    """One-time parameter folding (pure function of parameters).

    Hoisted out of the per-call path: M = D^T @ W and A^T never change between
    forward calls, so they must not be re-emitted as XLA ops per invocation.
    """
    m = jnp.dot(dct_m.T, weight)   # [T, H]
    adjt = adj.T                   # [P, P]
    return adjt, m, bias


@jax.jit
def dct_att_gcn_forward(x, adjt, m, bias):
    B, T, P = x.shape
    H = m.shape[1]

    flops = 2 * (B * T * P * P + B * P * T * H)
    bytes_accessed = 4 * (x.size + adjt.size + m.size + bias.size + B * P * H)

    vmem = pl.BlockSpec(memory_space=pltpu.MemorySpace.VMEM)
    return pl.pallas_call(
        dct_gcn_kernel,
        out_shape=jax.ShapeDtypeStruct((B, P, H), jnp.float32),
        in_specs=[vmem, vmem, vmem, vmem],   # whole arrays resident in VMEM
        out_specs=vmem,
        cost_estimate=pl.CostEstimate(
            flops=flops,
            transcendentals=B * P * H,
            bytes_accessed=bytes_accessed),
    )(x, adjt, m, bias)


def make_dct_matrix(n):
    """Orthonormal DCT-II basis, deterministic."""
    k = np.arange(n)[:, None]
    i = np.arange(n)[None, :]
    mat = np.sqrt(2.0 / n) * np.cos(np.pi * (2 * i + 1) * k / (2 * n))
    mat[0, :] = np.sqrt(1.0 / n)
    return jnp.asarray(mat, dtype=jnp.float32)


def reference_forward(x, dct_m, adj, weight, bias):
    """Pure-JAX reference (original op order) for correctness checking."""
    xd = jnp.einsum("ts,bsp->btp", dct_m, x)        # [B, T, P]
    g = jnp.transpose(xd, (0, 2, 1))                # [B, P, T]
    ag = jnp.einsum("pq,bqt->bpt", adj, g)          # [B, P, T]
    y = jnp.einsum("bpt,th->bph", ag, weight) + bias[None]
    return jnp.tanh(y)


if __name__ == "__main__":
    # Small shapes implied by the module family: pose_size=32 joint-dims,
    # seq_len=16 frames, hidden=32, batch=2.
    B, T, P, H = 2, 16, 32, 32

    key = jax.random.PRNGKey(0)
    kx, ka, kw, kb = jax.random.split(key, 4)

    x = jax.random.normal(kx, (B, T, P), dtype=jnp.float32)

    # Deterministic parameter init (synthetic; shapes follow the GCN layer).
    dct_m = make_dct_matrix(T)                                        # [T, T]
    adj = 0.1 * jax.random.normal(ka, (P, P), dtype=jnp.float32)      # learnable adjacency
    weight = (1.0 / np.sqrt(T)) * jax.random.normal(kw, (T, H), dtype=jnp.float32)
    bias = 0.01 * jax.random.normal(kb, (1, H), dtype=jnp.float32)

    # Model-setup-time parameter fold (done once, outside the per-call path).
    adjt, m_fold, b_fold = precompute_params(dct_m, adj, weight, bias)

    out = jax.block_until_ready(dct_att_gcn_forward(x, adjt, m_fold, b_fold))
    ref = jax.block_until_ready(reference_forward(x, dct_m, adj, weight, bias[0]))

    assert out.shape == (B, P, H)
    np.testing.assert_allclose(np.asarray(out), np.asarray(ref), rtol=1e-4, atol=1e-5)

    print("KERNEL_OK")
</pallas_src>

<mosaic_0001>
module attributes {stable_mosaic.version = 11 : i64} {
  func.func @dct_gcn_kernel(%arg0: memref<2x16x32xf32, #tpu.memory_space<vmem>>, %arg1: memref<32x32xf32, #tpu.memory_space<vmem>>, %arg2: memref<16x32xf32, #tpu.memory_space<vmem>>, %arg3: memref<1x32xf32, #tpu.memory_space<vmem>>, %arg4: memref<2x32x32xf32, #tpu.memory_space<vmem>>) attributes {dimension_semantics = [], scalar_prefetch = 0 : i64, scratch_operands = 0 : i64, tpu.core_type = #tpu.core_type<tc>} {
    %c0 = arith.constant 0 : index
    %c0_0 = arith.constant 0 : index
    %c0_1 = arith.constant 0 : index
    %0 = vector.load %arg0[%c0, %c0_0, %c0_1] : memref<2x16x32xf32, #tpu.memory_space<vmem>>, vector<2x16x32xf32>
    %1 = vector.shape_cast %0 : vector<2x16x32xf32> to vector<32x32xf32>
    %c0_2 = arith.constant 0 : index
    %c0_3 = arith.constant 0 : index
    %2 = vector.load %arg1[%c0_2, %c0_3] : memref<32x32xf32, #tpu.memory_space<vmem>>, vector<32x32xf32>
    %cst = arith.constant dense<0.000000e+00> : vector<32x32xf32>
    %3 = tpu.matmul %1, %2, %cst {dimension_numbers = #tpu.dot_dimension_numbers<[1], [0], [0], [1], [0, 0, 1, 1], [], []>} : vector<32x32xf32>, vector<32x32xf32>, vector<32x32xf32> -> vector<32x32xf32>
    %4 = vector.shape_cast %3 : vector<32x32xf32> to vector<2x16x32xf32>
    %5 = tpu.transpose %4, [0, 2, 1] : vector<2x16x32xf32> -> vector<2x32x16xf32>
    %6 = vector.shape_cast %5 : vector<2x32x16xf32> to vector<64x16xf32>
    %c0_4 = arith.constant 0 : index
    %c0_5 = arith.constant 0 : index
    %7 = vector.load %arg2[%c0_4, %c0_5] : memref<16x32xf32, #tpu.memory_space<vmem>>, vector<16x32xf32>
    %cst_6 = arith.constant dense<0.000000e+00> : vector<64x32xf32>
    %8 = tpu.matmul %6, %7, %cst_6 {dimension_numbers = #tpu.dot_dimension_numbers<[1], [0], [0], [1], [0, 0, 1, 1], [], []>} : vector<64x16xf32>, vector<16x32xf32>, vector<64x32xf32> -> vector<64x32xf32>
    %c0_7 = arith.constant 0 : index
    %c0_8 = arith.constant 0 : index
    %9 = vector.load %arg3[%c0_7, %c0_8] : memref<1x32xf32, #tpu.memory_space<vmem>>, vector<1x32xf32>
    %10 = vector.broadcast %9 : vector<1x32xf32> to vector<64x32xf32>
    %11 = arith.addf %8, %10 : vector<64x32xf32>
    %12 = math.tanh %11 : vector<64x32xf32>
    %13 = vector.shape_cast %12 : vector<64x32xf32> to vector<2x32x32xf32>
    %c0_9 = arith.constant 0 : index
    %c0_10 = arith.constant 0 : index
    %c0_11 = arith.constant 0 : index
    %14 = vector.load %arg4[%c0_9, %c0_10, %c0_11] : memref<2x32x32xf32, #tpu.memory_space<vmem>>, vector<2x32x32xf32>
    tpu.vector_store %arg4[%c0_9, %c0_10, %c0_11], %13 {strides = array<i32>} : memref<2x32x32xf32, #tpu.memory_space<vmem>>, vector<2x32x32xf32>,
    return
  }
}

</mosaic_0001>

<llo_original>
// kernel: dct_att_gcn_forward.1
$region0: #{dct_att_gcn_forward.1}
  #allocation0 [shape = 'u32[]', space=smem, size = 0x4, offset = 0x4, fixed_abs, tag = 'smem constant byte address 0x4 - core index']
  #allocation1 [shape = 'u32[72,128]{1,0:T(1,128)}', space=vmem, size = 0x9000, scoped, tag = 'internal scratch']
  %s0 = inlined_call_operand.hbm [shape: f32[2,16,32], index: 0, kind: input, shape index: {}]
  %s1 = inlined_call_operand.hbm [shape: f32[32,32], index: 1, kind: input, shape index: {}]
  %s2 = inlined_call_operand.hbm [shape: f32[16,32], index: 2, kind: input, shape index: {}]
  %s3 = inlined_call_operand.vmem [shape: f32[1,32], index: 3, kind: input, shape index: {}]
  %s4 = inlined_call_operand.hbm [shape: f32[2,32,32], index: 4, kind: output, shape index: {}]
  %s5 = sld [smem:[#allocation0]]
  $region38: #{dct_att_gcn_forward.1} parent=0
    _
  %s7 = ssub.s32 1, %s5
  %s8 = scalar_select 0, %s7, %s5
  $region1: #{dct_att_gcn_forward.1} parent=0
    #allocation2 [shape = 'u8[16384]{0}', space=vmem, size = 0x4000, scoped, tag = 'input window, operand 0, single buffered']
    #allocation3 [shape = 's32[1]{0}', space=sflag, size = 0x4, scoped, tag = 'scoped memory for dct_att_gcn_forward.1']
    #allocation4 [shape = 's32[1]{0}', space=sflag, size = 0x4, scoped, tag = 'scoped memory for dct_att_gcn_forward.1']
    #allocation5 [shape = 'u8[16384]{0}', space=vmem, size = 0x4000, scoped, tag = 'input window, operand 1, single buffered']
    #allocation6 [shape = 's32[1]{0}', space=sflag, size = 0x4, scoped, tag = 'scoped memory for dct_att_gcn_forward.1']
    #allocation7 [shape = 'u8[8192]{0}', space=vmem, size = 0x2000, scoped, tag = 'input window, operand 2, single buffered']
    #allocation8 [shape = 'u8[32768]{0}', space=vmem, size = 0x8000, scoped, tag = 'output window, operand 0, single buffered']
    %9 = vsyncpa [#allocation3], 0
    %10 = vsyncpa [#allocation6], 0
    %11 = vsyncpa [#allocation4], 0
    // Predicated region
    $region2: #{dct_att_gcn_forward.1} parent=1 // pred_check
      _
    $region3: #{dct_att_gcn_forward.1} parent=1 // pred_check_branch
      %13 = sbr.rel (0) target = $region5
    $region4: #{dct_att_gcn_forward.1} parent=1 // pred_region
      %15 = vsyncadd [#allocation3], 0
      %s16 = sshll.u32 %s0, 4
      %s17 = int_to_ptr.hbm [resolvable:$true] %s16
      %s18 = sshll.u32 [#allocation2], 4
      %s19 = int_to_ptr.vmem [resolvable:$true] %s18
      %24 = dma.hbm_to_vmem [thread:$0]  %s17, 512, %s19, [#allocation3], 128, 128, 8
    $region5: #{dct_att_gcn_forward.1} parent=1 // pred_fallthru
      _
    // Predicated region
    $region6: #{dct_att_gcn_forward.1} parent=1 // pred_check
      _
    $region7: #{dct_att_gcn_forward.1} parent=1 // pred_check_branch
      %26 = sbr.rel (0) target = $region9
    $region8: #{dct_att_gcn_forward.1} parent=1 // pred_region
      %28 = vsyncadd [#allocation6], 0
      %s29 = sshll.u32 %s1, 4
      %s30 = int_to_ptr.hbm [resolvable:$true] %s29
      %s31 = sshll.u32 [#allocation5], 4
      %s32 = int_to_ptr.vmem [resolvable:$true] %s31
      %37 = dma.hbm_to_vmem [thread:$0]  %s30, 512, %s32, [#allocation6], 128, 128, 8
    $region9: #{dct_att_gcn_forward.1} parent=1 // pred_fallthru
      _
    // Predicated region
    $region10: #{dct_att_gcn_forward.1} parent=1 // pred_check
      _
    $region11: #{dct_att_gcn_forward.1} parent=1 // pred_check_branch
      %39 = sbr.rel (0) target = $region13
    $region12: #{dct_att_gcn_forward.1} parent=1 // pred_region
      %41 = vsyncadd [#allocation6], 0
      %s42 = sshll.u32 %s2, 4
      %s43 = int_to_ptr.hbm [resolvable:$true] %s42
      %s44 = sshll.u32 [#allocation7], 4
      %s45 = int_to_ptr.vmem [resolvable:$true] %s44
      %50 = dma.hbm_to_vmem [thread:$0]  %s43, 256, %s45, [#allocation6], 128, 128, 8
    $region13: #{dct_att_gcn_forward.1} parent=1 // pred_fallthru
      _
    // Predicated region
    $region14: #{dct_att_gcn_forward.1} parent=1 // pred_check
      _
    $region15: #{dct_att_gcn_forward.1} parent=1 // pred_check_branch
      %52 = sbr.rel (0) target = $region17
    $region16: #{dct_att_gcn_forward.1} parent=1 // pred_region
      _
    $region17: #{dct_att_gcn_forward.1} parent=1 // pred_fallthru
      _
    // Predicated region
    $region18: #{dct_att_gcn_forward.1} parent=1 // pred_check
      _
    $region19: #{dct_att_gcn_forward.1} parent=1 // pred_check_branch
      %54 = sbr.rel (0) target = $region21
    $region20: #{dct_att_gcn_forward.1} parent=1 // pred_region
      %56 = dma.done [#allocation3], 512
    $region21: #{dct_att_gcn_forward.1} parent=1 // pred_fallthru
      _
    // Predicated region
    $region22: #{dct_att_gcn_forward.1} parent=1 // pred_check
      _
    $region23: #{dct_att_gcn_forward.1} parent=1 // pred_check_branch
      %58 = sbr.rel (0) target = $region25
    $region24: #{dct_att_gcn_forward.1} parent=1 // pred_region
      %60 = dma.done [#allocation6], 512
    $region25: #{dct_att_gcn_forward.1} parent=1 // pred_fallthru
      _
    // Predicated region
    $region26: #{dct_att_gcn_forward.1} parent=1 // pred_check
      _
    $region27: #{dct_att_gcn_forward.1} parent=1 // pred_check_branch
      %62 = sbr.rel (0) target = $region29
    $region28: #{dct_att_gcn_forward.1} parent=1 // pred_region
      %64 = dma.done [#allocation6], 256
    $region29: #{dct_att_gcn_forward.1} parent=1 // pred_fallthru
      _
    %v65 = vld [vmem:[#allocation2] sm:$0xff]
    %v66 = vld [vmem:[#allocation2 + $0x8] sm:$0xff]
    %v67 = vld [vmem:[#allocation2 + $0x10] sm:$0xff]
    %v68 = vld [vmem:[#allocation2 + $0x18] sm:$0xff]
    %v69 = vld [vmem:[#allocation5] sm:$0xff]
    %v70 = vld [vmem:[#allocation5 + $0x8] sm:$0xff]
    %v71 = vld [vmem:[#allocation5 + $0x10] sm:$0xff]
    %v72 = vld [vmem:[#allocation5 + $0x18] sm:$0xff]
    %vm73 = vcmask 261120
    %v75 = vsel %vm73, %v65, 0
    %v78 = vsel %vm73, %v66, 0
    %v81 = vsel %vm73, %v67, 0
    %v84 = vsel %vm73, %v68, 0
    %86 = vmatpush.msra.mxu0 0.0
    %87 = vmatpush.msra.mxu0 0.0
    %88 = vmatpush.msra.mxu0 0.0
    %89 = vmatpush.msra.mxu0 0.0
    %90 = vmatpush.msra.mxu0 0.0
    %91 = vmatpush.msra.mxu0 0.0
    %92 = vmatpush.msra.mxu0 0.0
    %93 = vmatpush.msra.mxu0 0.0
    %94 = vmatpush.msra.mxu0 0.0
    %95 = vmatpush.msra.mxu0 0.0
    %96 = vmatpush.msra.mxu0 0.0
    %97 = vmatpush.msra.mxu0 0.0
    %98 = vmatpush.msra.mxu0 %v72
    %99 = vmatpush.msra.mxu0 %v71
    %100 = vmatpush.msra.mxu0 %v70
    %101 = vmatpush.msra.mxu0 %v69
    %102 = vmatmul.f32.gmra.mxu0 %v75
    %v103 = vpop.f32.mrf.mxu0
    %v104 = vadd.f32 0.0, %v103
    %105 = vmatmul.f32.gmra.mxu0 %v78
    %v106 = vpop.f32.mrf.mxu0
    %v107 = vadd.f32 0.0, %v106
    %108 = vmatmul.f32.gmra.mxu0 %v81
    %v109 = vpop.f32.mrf.mxu0
    %v110 = vadd.f32 0.0, %v109
    %111 = vmatmul.f32.gmra.mxu0 %v84
    %v112 = vpop.f32.mrf.mxu0
    %v113 = vadd.f32 0.0, %v112
    %114 = vdwg.mxu0
    %115 = vxpose.xlu0.b32.start [1/16] %v104, 128
    %116 = vxpose.xlu0.b32.cont [2/16] %v107, 128
    %117 = vxpose.xlu0.b32.cont [3/16] 0.0, 128
    %118 = vxpose.xlu0.b32.cont [4/16] 0.0, 128
    %119 = vxpose.xlu0.b32.cont [5/16] 0.0, 128
    %120 = vxpose.xlu0.b32.cont [6/16] 0.0, 128
    %121 = vxpose.xlu0.b32.cont [7/16] 0.0, 128
    %122 = vxpose.xlu0.b32.cont [8/16] 0.0, 128
    %123 = vxpose.xlu0.b32.cont [9/16] 0.0, 128
    %124 = vxpose.xlu0.b32.cont [10/16] 0.0, 128
    %125 = vxpose.xlu0.b32.cont [11/16] 0.0, 128
    %126 = vxpose.xlu0.b32.cont [12/16] 0.0, 128
    %127 = vxpose.xlu0.b32.cont [13/16] 0.0, 128
    %128 = vxpose.xlu0.b32.cont [14/16] 0.0, 128
    %129 = vxpose.xlu0.b32.cont [15/16] 0.0, 128
    %130 = vxpose.xlu0.b32.end [16/16] 0.0, 128
    %v131 = vpop.trf.xlu0
    %v132 = vpop.trf.xlu0
    %v133 = vpop.trf.xlu0
    %v134 = vpop.trf.xlu0
    %v135 = vpop.trf.xlu0
    %v136 = vpop.trf.xlu0
    %v137 = vpop.trf.xlu0
    %v138 = vpop.trf.xlu0
    %v139 = vpop.trf.xlu0
    %v140 = vpop.trf.xlu0
    %v141 = vpop.trf.xlu0
    %v142 = vpop.trf.xlu0
    %v143 = vpop.trf.xlu0
    %v144 = vpop.trf.xlu0
    %v145 = vpop.trf.xlu0
    %v146 = vpop.trf.xlu0
    %147 = vxpose.xlu0.b32.start [1/16] %v110, 128
    %148 = vxpose.xlu0.b32.cont [2/16] %v113, 128
    %149 = vxpose.xlu0.b32.cont [3/16] 0.0, 128
    %150 = vxpose.xlu0.b32.cont [4/16] 0.0, 128
    %151 = vxpose.xlu0.b32.cont [5/16] 0.0, 128
    %152 = vxpose.xlu0.b32.cont [6/16] 0.0, 128
    %153 = vxpose.xlu0.b32.cont [7/16] 0.0, 128
    %154 = vxpose.xlu0.b32.cont [8/16] 0.0, 128
    %155 = vxpose.xlu0.b32.cont [9/16] 0.0, 128
    %156 = vxpose.xlu0.b32.cont [10/16] 0.0, 128
    %157 = vxpose.xlu0.b32.cont [11/16] 0.0, 128
    %158 = vxpose.xlu0.b32.cont [12/16] 0.0, 128
    %159 = vxpose.xlu0.b32.cont [13/16] 0.0, 128
    %160 = vxpose.xlu0.b32.cont [14/16] 0.0, 128
    %161 = vxpose.xlu0.b32.cont [15/16] 0.0, 128
    %162 = vxpose.xlu0.b32.end [16/16] 0.0, 128
    %v163 = vpop.trf.xlu0
    %v164 = vpop.trf.xlu0
    %v165 = vpop.trf.xlu0
    %v166 = vpop.trf.xlu0
    %v167 = vpop.trf.xlu0
    %v168 = vpop.trf.xlu0
    %v169 = vpop.trf.xlu0
    %v170 = vpop.trf.xlu0
    %v171 = vpop.trf.xlu0
    %v172 = vpop.trf.xlu0
    %v173 = vpop.trf.xlu0
    %v174 = vpop.trf.xlu0
    %v175 = vpop.trf.xlu0
    %v176 = vpop.trf.xlu0
    %v177 = vpop.trf.xlu0
    %v178 = vpop.trf.xlu0
    %v179 = vld [vmem:[#allocation7] sm:$0xff]
    %v180 = vld [vmem:[#allocation7 + $0x8] sm:$0xff]
    %v181 = vld [vmem:[%s3] sm:$0x1]
    %v183 = vperm.slane %v181, 0
    %vm185 = vcmask 130048
    %v187 = vsel %vm185, %v131, 0
    %v190 = vsel %vm185, %v132, 0
    %v193 = vsel %vm185, %v133, 0
    %v196 = vsel %vm185, %v134, 0
    %v199 = vsel %vm185, %v163, 0
    %v202 = vsel %vm185, %v164, 0
    %v205 = vsel %vm185, %v165, 0
    %v208 = vsel %vm185, %v166, 0
    %210 = vmatpush.msra.mxu0 0.0
    %211 = vmatpush.msra.mxu0 0.0
    %212 = vmatpush.msra.mxu0 0.0
    %213 = vmatpush.msra.mxu0 0.0
    %214 = vmatpush.msra.mxu0 0.0
    %215 = vmatpush.msra.mxu0 0.0
    %216 = vmatpush.msra.mxu0 0.0
    %217 = vmatpush.msra.mxu0 0.0
    %218 = vmatpush.msra.mxu0 0.0
    %219 = vmatpush.msra.mxu0 0.0
    %220 = vmatpush.msra.mxu0 0.0
    %221 = vmatpush.msra.mxu0 0.0
    %222 = vmatpush.msra.mxu0 0.0
    %223 = vmatpush.msra.mxu0 0.0
    %224 = vmatpush.msra.mxu0 %v180
    %225 = vmatpush.msra.mxu0 %v179
    %226 = vmatmul.f32.gmra.mxu0 %v187
    %v227 = vpop.f32.mrf.mxu0
    %v228 = vadd.f32 %v183, %v227
    %229 = vmatmul.f32.gmra.mxu0 %v190
    %v230 = vpop.f32.mrf.mxu0
    %v231 = vadd.f32 %v183, %v230
    %232 = vmatmul.f32.gmra.mxu0 %v193
    %v233 = vpop.f32.mrf.mxu0
    %v234 = vadd.f32 %v183, %v233
    %235 = vmatmul.f32.gmra.mxu0 %v196
    %v236 = vpop.f32.mrf.mxu0
    %v237 = vadd.f32 %v183, %v236
    %238 = vmatmul.f32.gmra.mxu0 %v199
    %v239 = vpop.f32.mrf.mxu0
    %v240 = vadd.f32 %v183, %v239
    %241 = vmatmul.f32.gmra.mxu0 %v202
    %v242 = vpop.f32.mrf.mxu0
    %v243 = vadd.f32 %v183, %v242
    %244 = vmatmul.f32.gmra.mxu0 %v205
    %v245 = vpop.f32.mrf.mxu0
    %v246 = vadd.f32 %v183, %v245
    %247 = vmatmul.f32.gmra.mxu0 %v208
    %v248 = vpop.f32.mrf.mxu0
    %v249 = vadd.f32 %v183, %v248
    %250 = vdwg.mxu0
    %v251 = vtanh.pop %v228
    %v252 = vtanh.pop %v231
    %v253 = vtanh.pop %v234
    %v254 = vtanh.pop %v237
    %v255 = vtanh.pop %v240
    %v256 = vtanh.pop %v243
    %v257 = vtanh.pop %v246
    %v258 = vtanh.pop %v249
    %259 = vst.msk [vmem:[#allocation8] sm:$0xff] %vm73, %v251
    %260 = vst.msk [vmem:[#allocation8 + $0x8] sm:$0xff] %vm73, %v252
    %261 = vst.msk [vmem:[#allocation8 + $0x10] sm:$0xff] %vm73, %v253
    %262 = vst.msk [vmem:[#allocation8 + $0x18] sm:$0xff] %vm73, %v254
    %263 = vst.msk [vmem:[#allocation8 + $0x20] sm:$0xff] %vm73, %v255
    %264 = vst.msk [vmem:[#allocation8 + $0x28] sm:$0xff] %vm73, %v256
    %265 = vst.msk [vmem:[#allocation8 + $0x30] sm:$0xff] %vm73, %v257
    %266 = vst.msk [vmem:[#allocation8 + $0x38] sm:$0xff] %vm73, %v258
    // Predicated region
    $region30: #{dct_att_gcn_forward.1} parent=1 // pred_check
      _
    $region31: #{dct_att_gcn_forward.1} parent=1 // pred_check_branch
      %268 = sbr.rel (0) target = $region33
    $region32: #{dct_att_gcn_forward.1} parent=1 // pred_region
      %270 = vsyncadd [#allocation4], 0
      %s271 = sshll.u32 [#allocation8], 4
      %s272 = int_to_ptr.vmem [resolvable:$true] %s271
      %s273 = sshll.u32 %s4, 4
      %s274 = int_to_ptr.hbm [resolvable:$true] %s273
      %279 = dma.vmem_to_hbm [thread:$0]  %s272, 1024, %s274, [#allocation4], 128, 128, 8
    $region33: #{dct_att_gcn_forward.1} parent=1 // pred_fallthru
      _
    // Predicated region
    $region34: #{dct_att_gcn_forward.1} parent=1 // pred_check
      _
    $region35: #{dct_att_gcn_forward.1} parent=1 // pred_check_branch
      %281 = sbr.rel (0) target = $region37
    $region36: #{dct_att_gcn_forward.1} parent=1 // pred_region
      %283 = dma.done [#allocation4], 1024
    $region37: #{dct_att_gcn_forward.1} parent=1 // pred_fallthru
      _
    %284 = vsyncpa [#allocation3], 1
    %285 = vsyncpa [#allocation6], 1
    %286 = vsyncpa [#allocation4], 1

</llo_original>
